<compile_context>
chip_gen: v7x
topology: tpu7x:2x2x1
jax: 0.10.0
libtpu: 0.0.40
codegen_flags: <defaults>
</compile_context>

<pallas_src>
import jax
import jax.numpy as jnp
from jax.experimental import pallas as pl
from jax.experimental.pallas import tpu as pltpu


def _prep_kernel(x_ref, pos_ref, anc_ref):
    """Per row-tile: unit-normalized positive and anchor embeddings.

    x_ref: (TM, M, D) tile of the [N, M, D] input (original layout, no transpose).
    pos_ref / anc_ref: (TM, D) outputs.
    """
    M = x_ref.shape[1]
    xs = x_ref[...]                                    # (TM, M, D)
    pos = xs[:, 0, :]
    acc = xs[:, 1, :]
    for m in range(2, M):                              # M small & static -> unrolled VPU adds
        acc = acc + xs[:, m, :]
    anc = acc * jnp.float32(1.0 / (M - 1))

    # F.cosine_similarity normalization (eps=1e-8):
    #   1 / max(||v||, eps) == rsqrt(max(||v||^2, eps^2))  -> EUP slot, VALU-free.
    eps2 = jnp.float32(1e-16)
    pos_ref[...] = pos * jax.lax.rsqrt(
        jnp.maximum(jnp.sum(pos * pos, axis=-1, keepdims=True), eps2))
    anc_ref[...] = anc * jax.lax.rsqrt(
        jnp.maximum(jnp.sum(anc * anc, axis=-1, keepdims=True), eps2))


def _cos_ce_kernel(w_ref, pos_ref, anc_ref, loss_ref, correct_ref):
    """Per row-tile: cross-entropy loss rows and top-1 correctness rows.

    pos_ref: (TM, D) tile of unit positives (pipelined).
    anc_ref: (N, D) unit anchors (resident across the grid).
    loss_ref / correct_ref: (TM, 1).
    """
    i = pl.program_id(0)
    tm, _ = pos_ref.shape
    n, _ = anc_ref.shape
    w = w_ref[0, 0]

    # NT matmul on the MXU: contract over D, f32 accumulate, no transpose copy.
    cos = jax.lax.dot_general(
        pos_ref[...], anc_ref[...],
        dimension_numbers=(((1,), (1,)), ((), ())),
        preferred_element_type=jnp.float32)                       # (TM, N)
    # TODO(synk): optionally cast pos/anc to bf16 before the dot (keep f32 accumulate)
    # for native MXU rate at large N*D, if the accuracy budget allows.

    # b cancels exactly in (logsumexp - diag) and never changes the row argmax, so the
    # bias is dropped from the whole stats path (one fewer N^2 VPU pass).
    cw = cos * w

    # Exact MXU diagonal: global row r of this tile corresponds to column i*TM + r.
    rows = jax.lax.broadcasted_iota(jnp.int32, (tm, n), 0) + i * tm
    cols = jax.lax.broadcasted_iota(jnp.int32, (tm, n), 1)
    diag = jnp.sum(jnp.where(rows == cols, cw, 0.0), axis=-1, keepdims=True)   # (TM, 1)

    # CrossEntropy with label = row index: loss_r = logsumexp(cw[r, :]) - cw[r, r].
    row_max = jnp.max(cw, axis=-1, keepdims=True)
    lse = jnp.log(jnp.sum(jnp.exp(cw - row_max), axis=-1, keepdims=True)) + row_max
    loss_ref[...] = lse - diag

    # Top-1 correct iff the (bit-exact, same-MXU-result) diagonal attains the row max.
    # An exact f32 tie with an *earlier* column would be scored wrong by torch.topk's
    # first-index rule; treated as measure-zero here.
    correct_ref[...] = (diag >= row_max).astype(jnp.float32)


def _pick_row_tile(n, d, budget_bytes=12 << 20):
    """Largest row tile (multiple of 8, dividing N) whose main-kernel working set fits a
    conservative VMEM budget (sized to leave headroom on v5e's 16 MiB scoped default and
    v7x's 64 MiB physical VMEM)."""
    cands = [t for t in (256, 128, 64, 32, 16, 8) if n % t == 0]
    if not cands:
        return n                                       # tiny / awkward N: one full-extent tile
    anc_bytes = n * d * 4
    for t in cands:
        est = 2 * anc_bytes + 2 * t * d * 4 + 4 * t * n * 4
        if est <= budget_bytes:
            return t
    return cands[-1]


@jax.jit
def angleproto_loss(x, w, b):
    """x: [N, M, D]; w, b: scalar AngleProto parameters. Returns (nloss, prec1)."""
    N, M, D = x.shape
    assert M >= 2, "need at least one anchor utterance (M >= 2)"
    x = jnp.asarray(x, jnp.float32)
    del b   # cancels exactly in the CE loss and never affects the top-1 argmax

    TM = _pick_row_tile(N, D)
    num_tiles = N // TM

    # Pass 1: unit positives / anchors. x is read once, in its original [N, M, D] layout.
    pos_u, anc_u = pl.pallas_call(
        _prep_kernel,
        out_shape=(jax.ShapeDtypeStruct((N, D), jnp.float32),
                   jax.ShapeDtypeStruct((N, D), jnp.float32)),
        grid=(num_tiles,),
        in_specs=[pl.BlockSpec((TM, M, D), lambda i: (i, 0, 0))],
        out_specs=(pl.BlockSpec((TM, D), lambda i: (i, 0)),
                   pl.BlockSpec((TM, D), lambda i: (i, 0))),
        compiler_params=pltpu.CompilerParams(dimension_semantics=("parallel",)),
    )(x)

    # Pass 2: per-row CE loss + top-1 correctness, row-tiled over the positives with the
    # normalized anchor matrix resident in VMEM.
    w_arr = jnp.asarray(w, jnp.float32).reshape(1, 1)

    # VMEM: resident anchors (+buffering) + pipelined positive tile + ~4 live (TM, N) f32
    # intermediates, with 2x headroom; capped at v7x physical VMEM.
    vmem_est = 2 * N * D * 4 + 2 * TM * D * 4 + 4 * TM * N * 4 + (1 << 20)
    vmem_limit = int(min(max(2 * vmem_est, 32 << 20), 64 << 20))

    loss_rows, correct_rows = pl.pallas_call(
        _cos_ce_kernel,
        out_shape=(jax.ShapeDtypeStruct((N, 1), jnp.float32),
                   jax.ShapeDtypeStruct((N, 1), jnp.float32)),
        grid=(num_tiles,),
        in_specs=[
            pl.BlockSpec(memory_space=pltpu.MemorySpace.SMEM),      # w (scalar)
            pl.BlockSpec((TM, D), lambda i: (i, 0)),                # positives, pipelined
            pl.BlockSpec((N, D), lambda i: (0, 0)),                 # anchors, resident
        ],
        out_specs=(
            pl.BlockSpec((TM, 1), lambda i: (i, 0)),
            pl.BlockSpec((TM, 1), lambda i: (i, 0)),
        ),
        compiler_params=pltpu.CompilerParams(
            dimension_semantics=("parallel",),
            vmem_limit_bytes=vmem_limit,
        ),
    )(w_arr, pos_u, anc_u)

    # TODO(synk): for very large stepsize N, also tile the anchor (column) axis with an
    # online logsumexp/max accumulator so the (TM, N) block itself stays bounded.
    nloss = jnp.mean(loss_rows)
    prec1 = jnp.mean(correct_rows) * 100.0
    return nloss, prec1


def _reference(x, w, b):
    x = jnp.asarray(x, jnp.float32)
    out_positive = x[:, 0, :]
    out_anchor = jnp.mean(x[:, 1:, :], axis=1)
    pos_u = out_positive / jnp.maximum(
        jnp.linalg.norm(out_positive, axis=-1, keepdims=True), 1e-8)
    anc_u = out_anchor / jnp.maximum(
        jnp.linalg.norm(out_anchor, axis=-1, keepdims=True), 1e-8)
    scaled = pos_u @ anc_u.T * w + b
    N = x.shape[0]
    logp = scaled - jax.scipy.special.logsumexp(scaled, axis=-1, keepdims=True)
    nloss = -jnp.mean(logp[jnp.arange(N), jnp.arange(N)])
    prec1 = jnp.mean(
        (jnp.argmax(scaled, axis=1) == jnp.arange(N)).astype(jnp.float32)) * 100.0
    return nloss, prec1


if __name__ == "__main__":
    key = jax.random.PRNGKey(0)
    N, M, D = 8, 3, 32            # stepsize=8 speakers, 3 utterances each, emb dim 32
    x = jax.random.normal(key, (N, M, D), dtype=jnp.float32)

    init_w, init_b = 10.0, -5.0   # module __init__ defaults

    nloss, prec1 = angleproto_loss(x, init_w, init_b)
    jax.block_until_ready((nloss, prec1))

    ref_loss, ref_prec1 = _reference(x, init_w, init_b)
    assert jnp.allclose(nloss, ref_loss, atol=1e-4, rtol=1e-4), (nloss, ref_loss)
    assert jnp.allclose(prec1, ref_prec1, atol=1e-3), (prec1, ref_prec1)

    print("KERNEL_OK")
</pallas_src>

<mosaic_0001>
module attributes {stable_mosaic.version = 11 : i64} {
  func.func @_cos_ce_kernel(%arg0: i32, %arg1: memref<1x1xf32, #tpu.memory_space<smem>>, %arg2: memref<8x32xf32, #tpu.memory_space<vmem>>, %arg3: memref<8x32xf32, #tpu.memory_space<vmem>>, %arg4: memref<8x1xf32, #tpu.memory_space<vmem>>, %arg5: memref<8x1xf32, #tpu.memory_space<vmem>>) attributes {dimension_semantics = [#tpu.dimension_semantics<parallel>], iteration_bounds = array<i64: 1>, scalar_prefetch = 0 : i64, scratch_operands = 0 : i64, tpu.core_type = #tpu.core_type<tc>, window_params = [{transform_indices = @transform_0, window_bounds = array<i64: 1, 1>}, {transform_indices = @transform_1, window_bounds = array<i64: 8, 32>}, {pipeline_mode = #tpu.pipeline_mode<synchronous>, transform_indices = @transform_2, window_bounds = array<i64: 8, 32>}, {transform_indices = @transform_3, window_bounds = array<i64: 8, 1>}, {transform_indices = @transform_4, window_bounds = array<i64: 8, 1>}]} {
    %c0 = arith.constant 0 : index
    %c0_0 = arith.constant 0 : index
    %0 = memref.load %arg1[%c0, %c0_0] : memref<1x1xf32, #tpu.memory_space<smem>>
    %c0_1 = arith.constant 0 : index
    %c0_2 = arith.constant 0 : index
    %1 = vector.load %arg2[%c0_1, %c0_2] : memref<8x32xf32, #tpu.memory_space<vmem>>, vector<8x32xf32>
    %c0_3 = arith.constant 0 : index
    %c0_4 = arith.constant 0 : index
    %2 = vector.load %arg3[%c0_3, %c0_4] : memref<8x32xf32, #tpu.memory_space<vmem>>, vector<8x32xf32>
    %cst = arith.constant dense<0.000000e+00> : vector<8x8xf32>
    %3 = tpu.matmul %1, %2, %cst {dimension_numbers = #tpu.dot_dimension_numbers<[1], [1], [0], [0], [0, 0, 1, 0], [], []>} : vector<8x32xf32>, vector<8x32xf32>, vector<8x8xf32> -> vector<8x8xf32>
    %4 = vector.broadcast %0 : f32 to vector<8x8xf32>
    %5 = arith.mulf %3, %4 : vector<8x8xf32>
    %6 = tpu.iota {dimensions = array<i32: 0>} : vector<8x8xi32>
    %c8_i32 = arith.constant 8 : i32
    %7 = arith.muli %arg0, %c8_i32 : i32
    %8 = vector.broadcast %7 : i32 to vector<8x8xi32>
    %9 = arith.addi %6, %8 : vector<8x8xi32>
    %10 = tpu.iota {dimensions = array<i32: 1>} : vector<8x8xi32>
    %11 = arith.cmpi eq, %9, %10 : vector<8x8xi32>
    %cst_5 = arith.constant 0.000000e+00 : f32
    %12 = vector.broadcast %cst_5 : f32 to vector<8x8xf32>
    %13 = arith.select %11, %5, %12 : vector<8x8xi1>, vector<8x8xf32>
    %cst_6 = arith.constant dense<0.000000e+00> : vector<8xf32>
    %14 = vector.multi_reduction <add>, %13, %cst_6 [1] : vector<8x8xf32> to vector<8xf32>
    %15 = vector.shape_cast %14 : vector<8xf32> to vector<8x1xf32>
    %cst_7 = arith.constant dense<0xFF800000> : vector<8xf32>
    %16 = vector.multi_reduction <maximumf>, %5, %cst_7 [1] : vector<8x8xf32> to vector<8xf32>
    %17 = vector.shape_cast %16 : vector<8xf32> to vector<8x1xf32>
    %18 = vector.broadcast %17 : vector<8x1xf32> to vector<8x8xf32>
    %19 = arith.subf %5, %18 : vector<8x8xf32>
    %20 = math.exp %19 : vector<8x8xf32>
    %cst_8 = arith.constant dense<0.000000e+00> : vector<8xf32>
    %21 = vector.multi_reduction <add>, %20, %cst_8 [1] : vector<8x8xf32> to vector<8xf32>
    %22 = vector.shape_cast %21 : vector<8xf32> to vector<8x1xf32>
    %23 = math.log %22 : vector<8x1xf32>
    %24 = arith.addf %23, %17 : vector<8x1xf32>
    %25 = arith.subf %24, %15 : vector<8x1xf32>
    %c0_9 = arith.constant 0 : index
    %c0_10 = arith.constant 0 : index
    %26 = vector.load %arg4[%c0_9, %c0_10] : memref<8x1xf32, #tpu.memory_space<vmem>>, vector<8x1xf32>
    tpu.vector_store %arg4[%c0_9, %c0_10], %25 {strides = array<i32>} : memref<8x1xf32, #tpu.memory_space<vmem>>, vector<8x1xf32>,
    %27 = arith.cmpf oge, %15, %17 : vector<8x1xf32>
    %28 = arith.extui %27 : vector<8x1xi1> to vector<8x1xi32>
    %29 = arith.sitofp %28 : vector<8x1xi32> to vector<8x1xf32>
    %c0_11 = arith.constant 0 : index
    %c0_12 = arith.constant 0 : index
    %30 = vector.load %arg5[%c0_11, %c0_12] : memref<8x1xf32, #tpu.memory_space<vmem>>, vector<8x1xf32>
    tpu.vector_store %arg5[%c0_11, %c0_12], %29 {strides = array<i32>} : memref<8x1xf32, #tpu.memory_space<vmem>>, vector<8x1xf32>,
    return
  }
  func.func @transform_0(%arg0: i32) -> (i32, i32) {
    %c0_i32 = arith.constant 0 : i32
    %c0_i32_0 = arith.constant 0 : i32
    %c0_i32_1 = arith.constant 0 : i32
    return %c0_i32, %c0_i32_0 : i32, i32
  }
  func.func @transform_1(%arg0: i32) -> (i32, i32) {
    %c0_i32 = arith.constant 0 : i32
    %c0_i32_0 = arith.constant 0 : i32
    return %arg0, %c0_i32 : i32, i32
  }
  func.func @transform_2(%arg0: i32) -> (i32, i32) {
    %c0_i32 = arith.constant 0 : i32
    %c0_i32_0 = arith.constant 0 : i32
    %c0_i32_1 = arith.constant 0 : i32
    return %c0_i32, %c0_i32_0 : i32, i32
  }
  func.func @transform_3(%arg0: i32) -> (i32, i32) {
    %c0_i32 = arith.constant 0 : i32
    %c0_i32_0 = arith.constant 0 : i32
    return %arg0, %c0_i32 : i32, i32
  }
  func.func @transform_4(%arg0: i32) -> (i32, i32) {
    %c0_i32 = arith.constant 0 : i32
    %c0_i32_0 = arith.constant 0 : i32
    return %arg0, %c0_i32 : i32, i32
  }
}

module attributes {stable_mosaic.version = 11 : i64} {
  func.func @_prep_kernel(%arg0: i32, %arg1: memref<8x3x32xf32, #tpu.memory_space<vmem>>, %arg2: memref<8x32xf32, #tpu.memory_space<vmem>>, %arg3: memref<8x32xf32, #tpu.memory_space<vmem>>) attributes {dimension_semantics = [#tpu.dimension_semantics<parallel>], iteration_bounds = array<i64: 1>, scalar_prefetch = 0 : i64, scratch_operands = 0 : i64, tpu.core_type = #tpu.core_type<tc>, window_params = [{transform_indices = @transform_0, window_bounds = array<i64: 8, 3, 32>}, {transform_indices = @transform_1, window_bounds = array<i64: 8, 32>}, {transform_indices = @transform_2, window_bounds = array<i64: 8, 32>}]} {
    %c0 = arith.constant 0 : index
    %c0_0 = arith.constant 0 : index
    %c0_1 = arith.constant 0 : index
    %0 = vector.load %arg1[%c0, %c0_0, %c0_1] : memref<8x3x32xf32, #tpu.memory_space<vmem>>, vector<8x3x32xf32>
    %1 = vector.extract_strided_slice %0 {offsets = [0, 0, 0], sizes = [8, 1, 32], strides = [1, 1, 1]} : vector<8x3x32xf32> to vector<8x1x32xf32>
    %2 = vector.shape_cast %1 : vector<8x1x32xf32> to vector<8x32xf32>
    %3 = vector.extract_strided_slice %0 {offsets = [0, 1, 0], sizes = [8, 1, 32], strides = [1, 1, 1]} : vector<8x3x32xf32> to vector<8x1x32xf32>
    %4 = vector.shape_cast %3 : vector<8x1x32xf32> to vector<8x32xf32>
    %5 = vector.extract_strided_slice %0 {offsets = [0, 2, 0], sizes = [8, 1, 32], strides = [1, 1, 1]} : vector<8x3x32xf32> to vector<8x1x32xf32>
    %6 = vector.shape_cast %5 : vector<8x1x32xf32> to vector<8x32xf32>
    %7 = arith.addf %4, %6 : vector<8x32xf32>
    %cst = arith.constant 5.000000e-01 : f32
    %8 = vector.broadcast %cst : f32 to vector<8x32xf32>
    %9 = arith.mulf %7, %8 : vector<8x32xf32>
    %10 = arith.mulf %2, %2 : vector<8x32xf32>
    %cst_2 = arith.constant dense<0.000000e+00> : vector<8xf32>
    %11 = vector.multi_reduction <add>, %10, %cst_2 [1] : vector<8x32xf32> to vector<8xf32>
    %12 = vector.shape_cast %11 : vector<8xf32> to vector<8x1xf32>
    %cst_3 = arith.constant 1.000000e-16 : f32
    %13 = vector.broadcast %cst_3 : f32 to vector<8x1xf32>
    %14 = arith.maximumf %12, %13 : vector<8x1xf32>
    %15 = math.rsqrt %14 : vector<8x1xf32>
    %16 = vector.broadcast %15 : vector<8x1xf32> to vector<8x32xf32>
    %17 = arith.mulf %2, %16 : vector<8x32xf32>
    %c0_4 = arith.constant 0 : index
    %c0_5 = arith.constant 0 : index
    %18 = vector.load %arg2[%c0_4, %c0_5] : memref<8x32xf32, #tpu.memory_space<vmem>>, vector<8x32xf32>
    tpu.vector_store %arg2[%c0_4, %c0_5], %17 {strides = array<i32>} : memref<8x32xf32, #tpu.memory_space<vmem>>, vector<8x32xf32>,
    %19 = arith.mulf %9, %9 : vector<8x32xf32>
    %cst_6 = arith.constant dense<0.000000e+00> : vector<8xf32>
    %20 = vector.multi_reduction <add>, %19, %cst_6 [1] : vector<8x32xf32> to vector<8xf32>
    %21 = vector.shape_cast %20 : vector<8xf32> to vector<8x1xf32>
    %cst_7 = arith.constant 1.000000e-16 : f32
    %22 = vector.broadcast %cst_7 : f32 to vector<8x1xf32>
    %23 = arith.maximumf %21, %22 : vector<8x1xf32>
    %24 = math.rsqrt %23 : vector<8x1xf32>
    %25 = vector.broadcast %24 : vector<8x1xf32> to vector<8x32xf32>
    %26 = arith.mulf %9, %25 : vector<8x32xf32>
    %c0_8 = arith.constant 0 : index
    %c0_9 = arith.constant 0 : index
    %27 = vector.load %arg3[%c0_8, %c0_9] : memref<8x32xf32, #tpu.memory_space<vmem>>, vector<8x32xf32>
    tpu.vector_store %arg3[%c0_8, %c0_9], %26 {strides = array<i32>} : memref<8x32xf32, #tpu.memory_space<vmem>>, vector<8x32xf32>,
    return
  }
  func.func @transform_0(%arg0: i32) -> (i32, i32, i32) {
    %c0_i32 = arith.constant 0 : i32
    %c0_i32_0 = arith.constant 0 : i32
    %c0_i32_1 = arith.constant 0 : i32
    return %arg0, %c0_i32, %c0_i32_0 : i32, i32, i32
  }
  func.func @transform_1(%arg0: i32) -> (i32, i32) {
    %c0_i32 = arith.constant 0 : i32
    %c0_i32_0 = arith.constant 0 : i32
    return %arg0, %c0_i32 : i32, i32
  }
  func.func @transform_2(%arg0: i32) -> (i32, i32) {
    %c0_i32 = arith.constant 0 : i32
    %c0_i32_0 = arith.constant 0 : i32
    return %arg0, %c0_i32 : i32, i32
  }
}

</mosaic_0001>

<llo_original>
// kernel: angleproto_loss.3
$region0: #{angleproto_loss.3}
  #allocation0 [shape = 'u32[]', space=smem, size = 0x4, offset = 0x4, fixed_abs, tag = 'smem constant byte address 0x4 - core index']
  #allocation1 [shape = 'u32[144,128]{1,0:T(1,128)}', space=vmem, size = 0x12000, scoped, tag = 'internal scratch']
  #allocation2 [shape = 'f32[1,1]{1,0:T(1,128)S(6)}', space=smem, size = 0x200, scoped, tag = 'scoped memory for angleproto_loss.3']
  %s0 = inlined_call_operand.<no memory space> [shape: f32[1,1], index: 0, kind: input, shape index: {}]
  %s1 = inlined_call_operand.vmem [shape: f32[8,32], index: 1, kind: input, shape index: {}]
  %s2 = inlined_call_operand.vmem [shape: f32[8,32], index: 2, kind: input, shape index: {}]
  %s3 = inlined_call_operand.vmem [shape: f32[8,1], index: 3, kind: output, shape index: {0}]
  %s4 = inlined_call_operand.vmem [shape: f32[8,1], index: 4, kind: output, shape index: {1}]
  %5 = xla_tuple %s3, %s4
  %s6 = sld [smem:[#allocation0]]
  $region30: #{angleproto_loss.3} parent=0
    _
  %s8 = ssub.s32 1, %s6
  %s9 = scalar_select 0, %s8, %s6
  %10 = sst [smem:[#allocation2]] %s0
  // Predicated region
  $region2: #{angleproto_loss.3} parent=0 // pred_check
    _
  $region3: #{angleproto_loss.3} parent=0 // pred_check_branch
    %12 = sbr.rel (0) target = $region5
  $region4: #{angleproto_loss.3} parent=0 // pred_region
    _
  $region5: #{angleproto_loss.3} parent=0 // pred_fallthru
    _
  // Predicated region
  $region6: #{angleproto_loss.3} parent=0 // pred_check
    _
  $region7: #{angleproto_loss.3} parent=0 // pred_check_branch
    %14 = sbr.rel (0) target = $region9
  $region8: #{angleproto_loss.3} parent=0 // pred_region
    _
  $region9: #{angleproto_loss.3} parent=0 // pred_fallthru
    _
  // Predicated region
  $region10: #{angleproto_loss.3} parent=0 // pred_check
    _
  $region11: #{angleproto_loss.3} parent=0 // pred_check_branch
    %16 = sbr.rel (0) target = $region13
  $region12: #{angleproto_loss.3} parent=0 // pred_region
    _
  $region13: #{angleproto_loss.3} parent=0 // pred_fallthru
    _
  %s17 = sld [smem:[#allocation2]]
  %v18 = vld [vmem:[%s1] sm:$0xff]
  %v19 = vld [vmem:[%s2] sm:$0xff]
  %vm20 = vcmask 261120
  %v22 = vsel %vm20, %v18, 0
  %v25 = vsel %vm20, %v19, 0
  %27 = vmatprep.subr.mxu0 0.0
  %28 = vmatpush1.xpose.msra.mxu0 %v25
  %29 = vmatprep.subr.mxu0 0.0
  %30 = vmatpush1.xpose.msra.mxu0 0.0
  %31 = vmatprep.subr.mxu0 0.0
  %32 = vmatpush1.xpose.msra.mxu0 0.0
  %33 = vmatprep.subr.mxu0 0.0
  %34 = vmatpush1.xpose.msra.mxu0 0.0
  %35 = vmatprep.subr.mxu0 0.0
  %36 = vmatpush1.xpose.msra.mxu0 0.0
  %37 = vmatprep.subr.mxu0 0.0
  %38 = vmatpush1.xpose.msra.mxu0 0.0
  %39 = vmatprep.subr.mxu0 0.0
  %40 = vmatpush1.xpose.msra.mxu0 0.0
  %41 = vmatprep.subr.mxu0 0.0
  %42 = vmatpush1.xpose.msra.mxu0 0.0
  %43 = vmatprep.subr.mxu0 0.0
  %44 = vmatpush1.xpose.msra.mxu0 0.0
  %45 = vmatprep.subr.mxu0 0.0
  %46 = vmatpush1.xpose.msra.mxu0 0.0
  %47 = vmatprep.subr.mxu0 0.0
  %48 = vmatpush1.xpose.msra.mxu0 0.0
  %49 = vmatprep.subr.mxu0 0.0
  %50 = vmatpush1.xpose.msra.mxu0 0.0
  %51 = vmatprep.subr.mxu0 0.0
  %52 = vmatpush1.xpose.msra.mxu0 0.0
  %53 = vmatprep.subr.mxu0 0.0
  %54 = vmatpush1.xpose.msra.mxu0 0.0
  %55 = vmatprep.subr.mxu0 0.0
  %56 = vmatpush1.xpose.msra.mxu0 0.0
  %57 = vmatprep.subr.mxu0 0.0
  %58 = vmatpush1.xpose.msra.mxu0 0.0
  %59 = vmatprep.subr.mxu0 0.0
  %60 = vmatpush1.xpose.msra.mxu0 0.0
  %61 = vmatprep.subr.mxu0 0.0
  %62 = vmatpush1.xpose.msra.mxu0 0.0
  %63 = vmatprep.subr.mxu0 0.0
  %64 = vmatpush1.xpose.msra.mxu0 0.0
  %65 = vmatprep.subr.mxu0 0.0
  %66 = vmatpush1.xpose.msra.mxu0 0.0
  %67 = vmatprep.subr.mxu0 0.0
  %68 = vmatpush1.xpose.msra.mxu0 0.0
  %69 = vmatprep.subr.mxu0 0.0
  %70 = vmatpush1.xpose.msra.mxu0 0.0
  %71 = vmatprep.subr.mxu0 0.0
  %72 = vmatpush1.xpose.msra.mxu0 0.0
  %73 = vmatprep.subr.mxu0 0.0
  %74 = vmatpush1.xpose.msra.mxu0 0.0
  %75 = vmatprep.subr.mxu0 0.0
  %76 = vmatpush1.xpose.msra.mxu0 0.0
  %77 = vmatprep.subr.mxu0 0.0
  %78 = vmatpush1.xpose.msra.mxu0 0.0
  %79 = vmatprep.subr.mxu0 0.0
  %80 = vmatpush1.xpose.msra.mxu0 0.0
  %81 = vmatprep.subr.mxu0 0.0
  %82 = vmatpush1.xpose.msra.mxu0 0.0
  %83 = vmatprep.subr.mxu0 0.0
  %84 = vmatpush1.xpose.msra.mxu0 0.0
  %85 = vmatprep.subr.mxu0 0.0
  %86 = vmatpush1.xpose.msra.mxu0 0.0
  %87 = vmatprep.subr.mxu0 0.0
  %88 = vmatpush1.xpose.msra.mxu0 0.0
  %89 = vmatprep.subr.mxu0 0.0
  %90 = vmatpush1.xpose.msra.mxu0 0.0
  %91 = vmatprep.mubr.f32.mxu0 0.0
  %92 = vmatmul.mubr.f32.gmra.mrb[0].mxu0 %v22
  %v93 = vpop.f32.mrb[0].mxu0
  %v94 = vadd.f32 0.0, %v93
  %v95 = vpop.f32.mrb[0].mxu0
  %96 = vdwg.mxu0
  %v97 = vstv %s17
  %v98 = vmul.f32 %v94, %v97
  %v99 = vlaneseq
  %v100 = vshrl.u32 %v99, 7
  %s101 = smul.u32 0, 8
  %v102 = vstv %s101
  %v103 = vadd.s32 %v100, %v102
  %v104 = vlaneseq
  %v105 = vand.u32 %v104, 127
  %vm106 = vcmp.eq.s32.totalorder %v103, %v105
  %v107 = vsel %vm106, %v98, 0.0
  %vm108 = vcmask 64512
  %v109 = vsel %vm108, %v107, 0.0
  %110 = vadd.xlane.f32.xlu0 %v109
  %v111 = vpop.xlane.xlu0 %110
  %v112 = vsel %vm108, %v98, -inf
  %113 = vmax.xlane.f32.xlu0 %v112
  %v114 = vpop.xlane.xlu0 %113
  %v115 = vsub.f32 %v98, %v114
  %v116 = vmul.f32 %v115, 1.442695
  %v117 = vpow.pop %v116
  %v118 = vsel %vm108, %v117, 0.0
  %119 = vadd.xlane.f32.xlu0 %v118
  %v120 = vpop.xlane.xlu0 %119
  %v121 = vlog2.pop %v120
  %v122 = vmul.f32 %v121, 0.6931472
  %v123 = vadd.f32 %v122, %v114
  %v124 = vsub.f32 %v123, %v111
  %vm125 = vcmask 7168
  %126 = vst.msk [vmem:[%s3] sm:$0xff] %vm125, %v124
  %vm127 = vcmp.ge.f32.partialorder %v111, %v114
  %v128 = vsel %vm127, 1, 0
  %v129 = vcvt.s32.f32 %v128
  %130 = vst.msk [vmem:[%s4] sm:$0xff] %vm125, %v129
  // Predicated region
  $region14: #{angleproto_loss.3} parent=0 // pred_check
    _
  $region15: #{angleproto_loss.3} parent=0 // pred_check_branch
    %132 = sbr.rel (0) target = $region17
  $region16: #{angleproto_loss.3} parent=0 // pred_region
    _
  $region17: #{angleproto_loss.3} parent=0 // pred_fallthru
    _
  // Predicated region
  $region18: #{angleproto_loss.3} parent=0 // pred_check
    _
  $region19: #{angleproto_loss.3} parent=0 // pred_check_branch
    %134 = sbr.rel (0) target = $region21
  $region20: #{angleproto_loss.3} parent=0 // pred_region
    _
  $region21: #{angleproto_loss.3} parent=0 // pred_fallthru
    _
  // Predicated region
  $region22: #{angleproto_loss.3} parent=0 // pred_check
    _
  $region23: #{angleproto_loss.3} parent=0 // pred_check_branch
    %136 = sbr.rel (0) target = $region25
  $region24: #{angleproto_loss.3} parent=0 // pred_region
    _
  $region25: #{angleproto_loss.3} parent=0 // pred_fallthru
    _
  // Predicated region
  $region26: #{angleproto_loss.3} parent=0 // pred_check
    _
  $region27: #{angleproto_loss.3} parent=0 // pred_check_branch
    %138 = sbr.rel (0) target = $region29
  $region28: #{angleproto_loss.3} parent=0 // pred_region
    _
  $region29: #{angleproto_loss.3} parent=0 // pred_fallthru
    _

// kernel: angleproto_loss.2
$region0: #{angleproto_loss.2}
  #allocation0 [shape = 'u32[]', space=smem, size = 0x4, offset = 0x4, fixed_abs, tag = 'smem constant byte address 0x4 - core index']
  #allocation1 [shape = 'u32[144,128]{1,0:T(1,128)}', space=vmem, size = 0x12000, scoped, tag = 'internal scratch']
  %s0 = inlined_call_operand.vmem [shape: f32[8,3,32], index: 0, kind: input, shape index: {}]
  %s1 = inlined_call_operand.vmem [shape: f32[8,32], index: 1, kind: output, shape index: {0}]
  %s2 = inlined_call_operand.vmem [shape: f32[8,32], index: 2, kind: output, shape index: {1}]
  %3 = xla_tuple %s1, %s2
  %s4 = sld [smem:[#allocation0]]
  $region22: #{angleproto_loss.2} parent=0
    _
  %s6 = ssub.s32 1, %s4
  %s7 = scalar_select 0, %s6, %s4
  // Predicated region
  $region2: #{angleproto_loss.2} parent=0 // pred_check
    _
  $region3: #{angleproto_loss.2} parent=0 // pred_check_branch
    %9 = sbr.rel (0) target = $region5
  $region4: #{angleproto_loss.2} parent=0 // pred_region
    _
  $region5: #{angleproto_loss.2} parent=0 // pred_fallthru
    _
  %v10 = vld [vmem:[%s0] sm:$0x7]
  %v11 = vld [vmem:[%s0 + $0x4] sm:$0x7]
  %v12 = vld [vmem:[%s0 + $0x8] sm:$0x7]
  %v13 = vld [vmem:[%s0 + $0xc] sm:$0x7]
  %v14 = vld [vmem:[%s0 + $0x10] sm:$0x7]
  %v15 = vld [vmem:[%s0 + $0x14] sm:$0x7]
  %v16 = vld [vmem:[%s0 + $0x18] sm:$0x7]
  %v17 = vld [vmem:[%s0 + $0x1c] sm:$0x7]
  %v26 = vrot.slane %v10, 1
  %v27 = vrot.slane %v11, 1
  %v28 = vrot.slane %v12, 1
  %v29 = vrot.slane %v13, 1
  %v30 = vrot.slane %v14, 1
  %v31 = vrot.slane %v15, 1
  %v32 = vrot.slane %v16, 1
  %v33 = vrot.slane %v17, 1
  %v42 = vadd.f32 %v10, %v26
  %v43 = vadd.f32 %v11, %v27
  %v44 = vadd.f32 %v12, %v28
  %v45 = vadd.f32 %v13, %v29
  %v46 = vadd.f32 %v14, %v30
  %v47 = vadd.f32 %v15, %v31
  %v48 = vadd.f32 %v16, %v32
  %v49 = vadd.f32 %v17, %v33
  %v50 = vmul.f32 %v42, 0.5
  %v51 = vmul.f32 %v43, 0.5
  %v52 = vmul.f32 %v44, 0.5
  %v53 = vmul.f32 %v45, 0.5
  %v54 = vmul.f32 %v46, 0.5
  %v55 = vmul.f32 %v47, 0.5
  %v56 = vmul.f32 %v48, 0.5
  %v57 = vmul.f32 %v49, 0.5
  %v58 = vmul.f32 %v10, %v10
  %v59 = vmul.f32 %v11, %v11
  %v60 = vmul.f32 %v12, %v12
  %v61 = vmul.f32 %v13, %v13
  %v62 = vmul.f32 %v14, %v14
  %v63 = vmul.f32 %v15, %v15
  %v64 = vmul.f32 %v16, %v16
  %v65 = vmul.f32 %v17, %v17
  %v74 = vrot.slane %v59, 7
  %vm75 = vcmask 1041409
  %v76 = vsel %vm75, %v74, %v58
  %v77 = vrot.slane %v60, 6
  %vm78 = vcmask 1042434
  %v79 = vsel %vm78, %v77, %v76
  %v80 = vrot.slane %v61, 5
  %vm81 = vcmask 1043459
  %v82 = vsel %vm81, %v80, %v79
  %v83 = vrot.slane %v62, 4
  %vm84 = vcmask 1044484
  %v85 = vsel %vm84, %v83, %v82
  %v86 = vrot.slane %v63, 3
  %vm87 = vcmask 1045509
  %v88 = vsel %vm87, %v86, %v85
  %v89 = vrot.slane %v64, 2
  %vm90 = vcmask 1046534
  %v91 = vsel %vm90, %v89, %v88
  %v92 = vrot.slane %v65, 1
  %vm93 = vcmask 1047559
  %v94 = vsel %vm93, %v92, %v91
  %vm96 = vcmask 261120
  %v97 = vsel %vm96, %v94, 0.0
  %98 = vadd.xlane.f32.xlu0 %v97
  %v99 = vpop.xlane.xlu0 %98
  %v100 = vmax.f32 %v99, 1e-16
  %v101 = vrsqrt.pop %v100
  %v103 = vrot.slane %v101, 1
  %v104 = vrot.slane %v101, 2
  %v105 = vrot.slane %v101, 3
  %v106 = vrot.slane %v101, 4
  %v107 = vrot.slane %v101, 5
  %v108 = vrot.slane %v101, 6
  %v109 = vrot.slane %v101, 7
  %v118 = vmul.f32 %v10, %v101
  %v119 = vmul.f32 %v11, %v103
  %v120 = vmul.f32 %v12, %v104
  %v121 = vmul.f32 %v13, %v105
  %v122 = vmul.f32 %v14, %v106
  %v123 = vmul.f32 %v15, %v107
  %v124 = vmul.f32 %v16, %v108
  %v125 = vmul.f32 %v17, %v109
  %v134 = vrot.slane %v119, 7
  %v135 = vsel %vm75, %v134, %v118
  %v136 = vrot.slane %v120, 6
  %v137 = vsel %vm78, %v136, %v135
  %v138 = vrot.slane %v121, 5
  %v139 = vsel %vm81, %v138, %v137
  %v140 = vrot.slane %v122, 4
  %v141 = vsel %vm84, %v140, %v139
  %v142 = vrot.slane %v123, 3
  %v143 = vsel %vm87, %v142, %v141
  %v144 = vrot.slane %v124, 2
  %v145 = vsel %vm90, %v144, %v143
  %v146 = vrot.slane %v125, 1
  %v147 = vsel %vm93, %v146, %v145
  %149 = vst.msk [vmem:[%s1] sm:$0xff] %vm96, %v147
  %v150 = vmul.f32 %v50, %v50
  %v151 = vmul.f32 %v51, %v51
  %v152 = vmul.f32 %v52, %v52
  %v153 = vmul.f32 %v53, %v53
  %v154 = vmul.f32 %v54, %v54
  %v155 = vmul.f32 %v55, %v55
  %v156 = vmul.f32 %v56, %v56
  %v157 = vmul.f32 %v57, %v57
  %v166 = vrot.slane %v151, 7
  %v167 = vsel %vm78, %v166, %v150
  %v168 = vrot.slane %v152, 6
  %v169 = vsel %vm81, %v168, %v167
  %v170 = vrot.slane %v153, 5
  %v171 = vsel %vm84, %v170, %v169
  %v172 = vrot.slane %v154, 4
  %v173 = vsel %vm87, %v172, %v171
  %v174 = vrot.slane %v155, 3
  %v175 = vsel %vm90, %v174, %v173
  %v176 = vrot.slane %v156, 2
  %v177 = vsel %vm93, %v176, %v175
  %v178 = vrot.slane %v157, 1
  %vm181 = vcmask 261121
  %v182 = vsel %vm181, %v177, 0.0
  %183 = vadd.xlane.f32.xlu0 %v182
  %v184 = vpop.xlane.xlu0 %183
  %vm185 = vcmask 253952
  %v186 = vsel %vm185, %v178, 0.0
  %187 = vadd.xlane.f32.xlu0 %v186
  %v188 = vpop.xlane.xlu0 %187
  %v189 = vmax.f32 %v184, 1e-16
  %v190 = vmax.f32 %v188, 1e-16
  %v191 = vrsqrt.pop %v189
  %v192 = vrsqrt.pop %v190
  %v195 = vrot.slane %v191, 1
  %v196 = vrot.slane %v191, 2
  %v197 = vrot.slane %v191, 3
  %v198 = vrot.slane %v191, 4
  %v199 = vrot.slane %v191, 5
  %v200 = vrot.slane %v191, 6
  %v201 = vrot.slane %v192, 7
  %v210 = vmul.f32 %v50, %v191
  %v211 = vmul.f32 %v51, %v195
  %v212 = vmul.f32 %v52, %v196
  %v213 = vmul.f32 %v53, %v197
  %v214 = vmul.f32 %v54, %v198
  %v215 = vmul.f32 %v55, %v199
  %v216 = vmul.f32 %v56, %v200
  %v217 = vmul.f32 %v57, %v201
  %v226 = vrot.slane %v211, 7
  %v227 = vsel %vm78, %v226, %v210
  %v228 = vrot.slane %v212, 6
  %v229 = vsel %vm81, %v228, %v227
  %v230 = vrot.slane %v213, 5
  %v231 = vsel %vm84, %v230, %v229
  %v232 = vrot.slane %v214, 4
  %v233 = vsel %vm87, %v232, %v231
  %v234 = vrot.slane %v215, 3
  %v235 = vsel %vm90, %v234, %v233
  %v236 = vrot.slane %v216, 2
  %v237 = vsel %vm93, %v236, %v235
  %v238 = vrot.slane %v217, 1
  %241 = vst.msk [vmem:[%s2 - $0x1] sm:$0xfe] %vm181, %v237
  %242 = vst.msk [vmem:[%s2 + $0x7] sm:$0x1] %vm185, %v238
  // Predicated region
  $region6: #{angleproto_loss.2} parent=0 // pred_check
    _
  $region7: #{angleproto_loss.2} parent=0 // pred_check_branch
    %244 = sbr.rel (0) target = $region9
  $region8: #{angleproto_loss.2} parent=0 // pred_region
    _
  $region9: #{angleproto_loss.2} parent=0 // pred_fallthru
    _
  // Predicated region
  $region10: #{angleproto_loss.2} parent=0 // pred_check
    _
  $region11: #{angleproto_loss.2} parent=0 // pred_check_branch
    %246 = sbr.rel (0) target = $region13
  $region12: #{angleproto_loss.2} parent=0 // pred_region
    _
  $region13: #{angleproto_loss.2} parent=0 // pred_fallthru
    _
  // Predicated region
  $region14: #{angleproto_loss.2} parent=0 // pred_check
    _
  $region15: #{angleproto_loss.2} parent=0 // pred_check_branch
    %248 = sbr.rel (0) target = $region17
  $region16: #{angleproto_loss.2} parent=0 // pred_region
    _
  $region17: #{angleproto_loss.2} parent=0 // pred_fallthru
    _
  // Predicated region
  $region18: #{angleproto_loss.2} parent=0 // pred_check
    _
  $region19: #{angleproto_loss.2} parent=0 // pred_check_branch
    %250 = sbr.rel (0) target = $region21
  $region20: #{angleproto_loss.2} parent=0 // pred_region
    _
  $region21: #{angleproto_loss.2} parent=0 // pred_fallthru
    _

</llo_original>
